<compile_context>
chip_gen: v7x
topology: tpu7x:2x2x1
jax: 0.10.0
libtpu: 0.0.40
codegen_flags: <defaults>
</compile_context>

<pallas_src>
import jax
import jax.numpy as jnp
from jax.experimental import pallas as pl
from jax.experimental.pallas import tpu as pltpu


def _tfblock_kernel(x_ref, w1_ref, b1_ref, w2_ref, b2_ref, o_ref):
    # x_ref : (C_in,    tl)      slab of spatial columns for one batch element
    # w1_ref: (C_inter, C_in)    encoder 1x1 conv weight (squeezed)
    # b1_ref: (C_inter, 1)
    # w2_ref: (C_in,    C_inter) decoder 1x1 conv weight (squeezed)
    # b2_ref: (C_in,    1)
    # o_ref : (C_in,    tl)
    h = jnp.dot(w1_ref[...], x_ref[...],
                preferred_element_type=jnp.float32) + b1_ref[...]
    y = jnp.dot(w2_ref[...], h.astype(w2_ref.dtype),
                preferred_element_type=jnp.float32) + b2_ref[...]
    o_ref[...] = y.astype(o_ref.dtype)


def tfblock_forward(x_nchw, w1, b1, w2, b2, *, tl=512):
    """Fused TFblock forward.

    x_nchw: (N, C_in, H, W)
    w1:     (C_inter, C_in)   -- Conv2d(dim_in, dim_inter, 1).weight squeezed
    b1:     (C_inter,)
    w2:     (C_in, C_inter)   -- Conv2d(dim_inter, dim_in, 1).weight squeezed
    b2:     (C_in,)
    returns (N, C_in, H, W)
    """
    N, C_in, H, W = x_nchw.shape
    C_inter = w1.shape[0]
    HW = H * W

    # Free view: flatten spatial so the lane (last) dim is spatial.
    x3 = x_nchw.reshape(N, C_in, HW)
    b1c = b1.reshape(C_inter, 1)
    b2c = b2.reshape(C_in, 1)

    # Spatial tile: keep it a multiple of 128 lanes and no bigger than the
    # (rounded-up) spatial extent.
    tl = min(tl, pl.cdiv(HW, 128) * 128)
    tl = max(128, (tl // 128) * 128)

    grid = (N, pl.cdiv(HW, tl))  # ragged last tile handled by Pallas masking

    out3 = pl.pallas_call(
        _tfblock_kernel,
        out_shape=jax.ShapeDtypeStruct((N, C_in, HW), x_nchw.dtype),
        grid_spec=pltpu.PrefetchScalarGridSpec(
            num_scalar_prefetch=0,
            grid=grid,
            in_specs=[
                # batch dim squeezed out of the kernel view
                pl.BlockSpec((None, C_in, tl), lambda n, j: (n, 0, j)),
                pl.BlockSpec((C_inter, C_in), lambda n, j: (0, 0)),
                pl.BlockSpec((C_inter, 1), lambda n, j: (0, 0)),
                pl.BlockSpec((C_in, C_inter), lambda n, j: (0, 0)),
                pl.BlockSpec((C_in, 1), lambda n, j: (0, 0)),
            ],
            out_specs=pl.BlockSpec((None, C_in, tl), lambda n, j: (n, 0, j)),
        ),
        compiler_params=pltpu.CompilerParams(
            dimension_semantics=("parallel", "parallel"),
            vmem_limit_bytes=32 * 1024 * 1024,
        ),
    )(x3, w1, b1c, w2, b2c)

    # Free view back to NCHW (no transpose needed).
    return out3.reshape(N, C_in, H, W)


def tfblock_reference(x, w1, b1, w2, b2):
    # Pure-JAX reference: 1x1 conv == channel matmul (NCHW-native einsum).
    h = jnp.einsum('ic,nchw->nihw', w1, x) + b1[None, :, None, None]
    y = jnp.einsum('ci,nihw->nchw', w2, h) + b2[None, :, None, None]
    return y


def _run_case(key, N, C_in, C_inter, H, W, tl):
    kx, kw1, kb1, kw2, kb2 = jax.random.split(key, 5)
    x = jax.random.normal(kx, (N, C_in, H, W), dtype=jnp.float32)
    # Conv2d(dim_in, dim_inter, 1).weight is (C_inter, C_in, 1, 1); we keep
    # the squeezed (C_inter, C_in) form (and (C_in, C_inter) for the decoder).
    w1 = jax.random.normal(kw1, (C_inter, C_in), dtype=jnp.float32) * 0.1
    b1 = jax.random.normal(kb1, (C_inter,), dtype=jnp.float32) * 0.1
    w2 = jax.random.normal(kw2, (C_in, C_inter), dtype=jnp.float32) * 0.1
    b2 = jax.random.normal(kb2, (C_in,), dtype=jnp.float32) * 0.1

    out = tfblock_forward(x, w1, b1, w2, b2, tl=tl)
    out = jax.block_until_ready(out)

    ref = tfblock_reference(x, w1, b1, w2, b2)
    assert out.shape == (N, C_in, H, W)
    assert jnp.allclose(out, ref, atol=1e-3, rtol=1e-3), (
        f"mismatch: max abs err {jnp.max(jnp.abs(out - ref))}")


if __name__ == "__main__":
    key = jax.random.PRNGKey(0)
    k1, k2 = jax.random.split(key, 2)

    # Case 1: small shapes consistent with the module (HW a multiple of the
    # spatial tile) -> grid (2, 2), lane-dense 512-wide tiles.
    _run_case(k1, N=2, C_in=24, C_inter=8, H=32, W=32, tl=512)

    # Case 2: ragged spatial extent + channel count not a multiple of 8
    # (like the production dim_in=521) -> exercises pl.cdiv + block masking.
    _run_case(k2, N=2, C_in=21, C_inter=6, H=18, W=18, tl=512)

    print("KERNEL_OK")
</pallas_src>

<mosaic_0001>
module attributes {stable_mosaic.version = 11 : i64} {
  func.func @_tfblock_kernel(%arg0: i32, %arg1: i32, %arg2: memref<1x24x512xf32, #tpu.memory_space<vmem>>, %arg3: memref<8x24xf32, #tpu.memory_space<vmem>>, %arg4: memref<8x1xf32, #tpu.memory_space<vmem>>, %arg5: memref<24x8xf32, #tpu.memory_space<vmem>>, %arg6: memref<24x1xf32, #tpu.memory_space<vmem>>, %arg7: memref<1x24x512xf32, #tpu.memory_space<vmem>>) attributes {dimension_semantics = [#tpu.dimension_semantics<parallel>, #tpu.dimension_semantics<parallel>], iteration_bounds = array<i64: 2, 2>, scalar_prefetch = 0 : i64, scratch_operands = 0 : i64, tpu.core_type = #tpu.core_type<tc>, window_params = [{transform_indices = @transform_0, window_bounds = array<i64: 1, 24, 512>}, {pipeline_mode = #tpu.pipeline_mode<synchronous>, transform_indices = @transform_1, window_bounds = array<i64: 8, 24>}, {pipeline_mode = #tpu.pipeline_mode<synchronous>, transform_indices = @transform_2, window_bounds = array<i64: 8, 1>}, {pipeline_mode = #tpu.pipeline_mode<synchronous>, transform_indices = @transform_3, window_bounds = array<i64: 24, 8>}, {pipeline_mode = #tpu.pipeline_mode<synchronous>, transform_indices = @transform_4, window_bounds = array<i64: 24, 1>}, {transform_indices = @transform_5, window_bounds = array<i64: 1, 24, 512>}]} {
    %c0 = arith.constant 0 : index
    %c0_0 = arith.constant 0 : index
    %0 = vector.load %arg3[%c0, %c0_0] : memref<8x24xf32, #tpu.memory_space<vmem>>, vector<8x24xf32>
    %c0_1 = arith.constant 0 : index
    %c0_2 = arith.constant 0 : index
    %c0_3 = arith.constant 0 : index
    %1 = vector.load %arg2[%c0_1, %c0_2, %c0_3] : memref<1x24x512xf32, #tpu.memory_space<vmem>>, vector<1x24x512xf32>
    %2 = vector.shape_cast %1 : vector<1x24x512xf32> to vector<24x512xf32>
    %cst = arith.constant dense<0.000000e+00> : vector<8x512xf32>
    %3 = tpu.matmul %0, %2, %cst {dimension_numbers = #tpu.dot_dimension_numbers<[1], [0], [0], [1], [0, 0, 1, 1], [], []>} : vector<8x24xf32>, vector<24x512xf32>, vector<8x512xf32> -> vector<8x512xf32>
    %c0_4 = arith.constant 0 : index
    %c0_5 = arith.constant 0 : index
    %4 = vector.load %arg4[%c0_4, %c0_5] : memref<8x1xf32, #tpu.memory_space<vmem>>, vector<8x1xf32>
    %5 = vector.broadcast %4 : vector<8x1xf32> to vector<8x512xf32>
    %6 = arith.addf %3, %5 : vector<8x512xf32>
    %c0_6 = arith.constant 0 : index
    %c0_7 = arith.constant 0 : index
    %7 = vector.load %arg5[%c0_6, %c0_7] : memref<24x8xf32, #tpu.memory_space<vmem>>, vector<24x8xf32>
    %cst_8 = arith.constant dense<0.000000e+00> : vector<24x512xf32>
    %8 = tpu.matmul %7, %6, %cst_8 {dimension_numbers = #tpu.dot_dimension_numbers<[1], [0], [0], [1], [0, 0, 1, 1], [], []>} : vector<24x8xf32>, vector<8x512xf32>, vector<24x512xf32> -> vector<24x512xf32>
    %c0_9 = arith.constant 0 : index
    %c0_10 = arith.constant 0 : index
    %9 = vector.load %arg6[%c0_9, %c0_10] : memref<24x1xf32, #tpu.memory_space<vmem>>, vector<24x1xf32>
    %10 = vector.broadcast %9 : vector<24x1xf32> to vector<24x512xf32>
    %11 = arith.addf %8, %10 : vector<24x512xf32>
    %c0_11 = arith.constant 0 : index
    %c0_12 = arith.constant 0 : index
    %c0_13 = arith.constant 0 : index
    %12 = vector.load %arg7[%c0_11, %c0_12, %c0_13] : memref<1x24x512xf32, #tpu.memory_space<vmem>>, vector<1x24x512xf32>
    %13 = vector.shape_cast %12 : vector<1x24x512xf32> to vector<24x512xf32>
    %14 = vector.shape_cast %11 : vector<24x512xf32> to vector<1x24x512xf32>
    tpu.vector_store %arg7[%c0_11, %c0_12, %c0_13], %14 {strides = array<i32>} : memref<1x24x512xf32, #tpu.memory_space<vmem>>, vector<1x24x512xf32>,
    return
  }
  func.func @transform_0(%arg0: i32, %arg1: i32) -> (i32, i32, i32) {
    %c0_i32 = arith.constant 0 : i32
    %c0_i32_0 = arith.constant 0 : i32
    return %arg0, %c0_i32, %arg1 : i32, i32, i32
  }
  func.func @transform_1(%arg0: i32, %arg1: i32) -> (i32, i32) {
    %c0_i32 = arith.constant 0 : i32
    %c0_i32_0 = arith.constant 0 : i32
    %c0_i32_1 = arith.constant 0 : i32
    return %c0_i32, %c0_i32_0 : i32, i32
  }
  func.func @transform_2(%arg0: i32, %arg1: i32) -> (i32, i32) {
    %c0_i32 = arith.constant 0 : i32
    %c0_i32_0 = arith.constant 0 : i32
    %c0_i32_1 = arith.constant 0 : i32
    return %c0_i32, %c0_i32_0 : i32, i32
  }
  func.func @transform_3(%arg0: i32, %arg1: i32) -> (i32, i32) {
    %c0_i32 = arith.constant 0 : i32
    %c0_i32_0 = arith.constant 0 : i32
    %c0_i32_1 = arith.constant 0 : i32
    return %c0_i32, %c0_i32_0 : i32, i32
  }
  func.func @transform_4(%arg0: i32, %arg1: i32) -> (i32, i32) {
    %c0_i32 = arith.constant 0 : i32
    %c0_i32_0 = arith.constant 0 : i32
    %c0_i32_1 = arith.constant 0 : i32
    return %c0_i32, %c0_i32_0 : i32, i32
  }
  func.func @transform_5(%arg0: i32, %arg1: i32) -> (i32, i32, i32) {
    %c0_i32 = arith.constant 0 : i32
    %c0_i32_0 = arith.constant 0 : i32
    return %arg0, %c0_i32, %arg1 : i32, i32, i32
  }
}

</mosaic_0001>

<llo_original>
// kernel: tpu_custom_call.1
$region0: #{tpu_custom_call.1}
  #allocation0 [shape = 'u32[]', space=smem, size = 0x4, offset = 0x4, fixed_abs, tag = 'smem constant byte address 0x4 - core index']
  #allocation1 [shape = 'u32[144,128]{1,0:T(1,128)}', space=vmem, size = 0x12000, scoped, tag = 'internal scratch']
  %s0 = inlined_call_operand.hbm [shape: f32[2,24,1024], index: 0, kind: input, shape index: {}]
  %s1 = inlined_call_operand.vmem [shape: f32[8,24], index: 1, kind: input, shape index: {}]
  %s2 = inlined_call_operand.vmem [shape: f32[8,1], index: 2, kind: input, shape index: {}]
  %s3 = inlined_call_operand.vmem [shape: f32[24,8], index: 3, kind: input, shape index: {}]
  %s4 = inlined_call_operand.vmem [shape: f32[24,1], index: 4, kind: input, shape index: {}]
  %s5 = inlined_call_operand.hbm [shape: f32[2,24,1024], index: 5, kind: output, shape index: {}]
  %s6 = sld [smem:[#allocation0]]
  $region57: #{tpu_custom_call.1} parent=0
    _
  %s8 = ssub.s32 1, %s6
  %s9 = scalar_select 0, %s8, %s6
  $region1: #{tpu_custom_call.1} parent=0
    #allocation2 [shape = 'u8[98304]{0}', space=vmem, size = 0x18000, scoped, tag = 'input window, operand 0']
    #allocation3 [shape = 's32[2]{0}', space=sflag, size = 0x8, scoped, tag = 'scoped memory for tpu_custom_call.1']
    #allocation4 [shape = 's32[2]{0}', space=sflag, size = 0x8, scoped, tag = 'scoped memory for tpu_custom_call.1']
    #allocation5 [shape = 'u8[98304]{0}', space=vmem, size = 0x18000, scoped, tag = 'output window, operand 0']
    %10 = vsyncpa [#allocation3], 0
    %s11 = scalar_lea.sflag [#allocation3], 1
    %12 = vsyncpa %s11, 0
    %13 = vsyncpa [#allocation4], 0
    %s14 = scalar_lea.sflag [#allocation4], 1
    %15 = vsyncpa %s14, 0
    loop: start=0, step=1, limit=6
    $region2: #{tpu_custom_call.1} parent=1 // loop_pre_header
      _
    $region3: #{tpu_custom_call.1} parent=1 // loop_header
      %s17 = sphi 0, %s21
      %p18 = scmp.ge.s32.totalorder %s17, 6
      %s24 = sphi 0, %s36
      %s25 = sphi 0, %s32
      %s26 = sphi 0, %s24
      %s27 = sphi 0, %s25
      %s28 = sphi 0, %s26
      %s29 = sphi 0, %s27
      %s41 = sphi 0, %s43
      %s44 = sphi 0, %s41
      %s45 = sphi 0, %s44
      %s61 = sphi 0, %s45
      %s65 = sphi 0, %s65
      %s67 = sphi 0, %s65
      %s68 = sphi 0, %s67
      %s82 = sphi 0, %s68
      %s86 = sphi 0, %s86
      %s88 = sphi 0, %s86
      %s89 = sphi 0, %s88
      %s103 = sphi 0, %s89
      %s107 = sphi 0, %s107
      %s109 = sphi 0, %s107
      %s110 = sphi 0, %s109
      %s124 = sphi 0, %s110
      %s128 = sphi 0, %s128
      %s130 = sphi 0, %s128
      %s131 = sphi 0, %s130
      %s145 = sphi 0, %s131
      %s153 = sphi 0, %s155
      %s156 = sphi 0, %s153
      %s157 = sphi 0, %s156
      %s173 = sphi 0, %s157
    $region4: #{tpu_custom_call.1} parent=1 // loop_header_branch
      %20 = sbr.rel (%p18) target = $region8
    $region5: #{tpu_custom_call.1} parent=1 // loop_body
      %s22 = ssub.s32 %s17, 1
      %s23 = ssub.s32 %s17, 2
      %s30 = sadd.s32 1, %s25
      %p31 = scmp.ge.s32.totalorder %s30, 2
      %s32 = scalar_select %p31, 0, %s30
      %s33 = sadd.s32 1, %s24
      %s34 = scalar_select %p31, %s33, %s24
      %p35 = scmp.ge.s32.totalorder %s34, 2
      %s36 = scalar_select %p35, 0, %s34
      %s37 = ssub.s32 %s24, %s36
      %s38 = ssub.s32 %s25, %s32
      %s39 = sor.u32 %s37, %s38
      %p40 = scmp.eq.s32.totalorder %s39, 0
      %s42 = sadd.s32 %s41, 1
      %s43 = scalar_select %p40, %s41, %s42
      %p46 = pneg %p40
      %p47 = scmp.eq.s32.totalorder %s17, 3
      %p48 = por %p46, %p47
      %p49 = scmp.ne.s32.totalorder %s41, %s44
      %p50 = scmp.eq.s32.totalorder %s17, 0
      %p51 = por %p49, %p50
      %p52 = scmp.ne.s32.totalorder %s41, %s44
      %p53 = scmp.eq.s32.totalorder %s22, 3
      %p54 = por %p52, %p53
      %p55 = scmp.ne.s32.totalorder %s44, %s45
      %p56 = scmp.eq.s32.totalorder %s22, 0
      %p57 = por %p55, %p56
      %p58 = scmp.ne.s32.totalorder %s44, %s45
      %p59 = scmp.eq.s32.totalorder %s23, 3
      %p60 = por %p58, %p59
      %p62 = scmp.ne.s32.totalorder %s45, %s61
      %p63 = scmp.eq.s32.totalorder %s23, 0
      %p64 = por %p62, %p63
      %s66 = sadd.s32 %s65, 1
      %p69 = scmp.eq.s32.totalorder %s17, 3
      %p70 = scmp.ne.s32.totalorder %s65, %s67
      %p71 = scmp.eq.s32.totalorder %s17, 0
      %p72 = por %p70, %p71
      %p73 = scmp.ne.s32.totalorder %s65, %s67
      %p74 = scmp.eq.s32.totalorder %s22, 3
      %p75 = por %p73, %p74
      %p76 = scmp.ne.s32.totalorder %s67, %s68
      %p77 = scmp.eq.s32.totalorder %s22, 0
      %p78 = por %p76, %p77
      %p79 = scmp.ne.s32.totalorder %s67, %s68
      %p80 = scmp.eq.s32.totalorder %s23, 3
      %p81 = por %p79, %p80
      %p83 = scmp.ne.s32.totalorder %s68, %s82
      %p84 = scmp.eq.s32.totalorder %s23, 0
      %p85 = por %p83, %p84
      %s87 = sadd.s32 %s86, 1
      %p90 = scmp.eq.s32.totalorder %s17, 3
      %p91 = scmp.ne.s32.totalorder %s86, %s88
      %p92 = scmp.eq.s32.totalorder %s17, 0
      %p93 = por %p91, %p92
      %p94 = scmp.ne.s32.totalorder %s86, %s88
      %p95 = scmp.eq.s32.totalorder %s22, 3
      %p96 = por %p94, %p95
      %p97 = scmp.ne.s32.totalorder %s88, %s89
      %p98 = scmp.eq.s32.totalorder %s22, 0
      %p99 = por %p97, %p98
      %p100 = scmp.ne.s32.totalorder %s88, %s89
      %p101 = scmp.eq.s32.totalorder %s23, 3
      %p102 = por %p100, %p101
      %p104 = scmp.ne.s32.totalorder %s89, %s103
      %p105 = scmp.eq.s32.totalorder %s23, 0
      %p106 = por %p104, %p105
      %s108 = sadd.s32 %s107, 1
      %p111 = scmp.eq.s32.totalorder %s17, 3
      %p112 = scmp.ne.s32.totalorder %s107, %s109
      %p113 = scmp.eq.s32.totalorder %s17, 0
      %p114 = por %p112, %p113
      %p115 = scmp.ne.s32.totalorder %s107, %s109
      %p116 = scmp.eq.s32.totalorder %s22, 3
      %p117 = por %p115, %p116
      %p118 = scmp.ne.s32.totalorder %s109, %s110
      %p119 = scmp.eq.s32.totalorder %s22, 0
      %p120 = por %p118, %p119
      %p121 = scmp.ne.s32.totalorder %s109, %s110
      %p122 = scmp.eq.s32.totalorder %s23, 3
      %p123 = por %p121, %p122
      %p125 = scmp.ne.s32.totalorder %s110, %s124
      %p126 = scmp.eq.s32.totalorder %s23, 0
      %p127 = por %p125, %p126
      %s129 = sadd.s32 %s128, 1
      %p132 = scmp.eq.s32.totalorder %s17, 3
      %p133 = scmp.ne.s32.totalorder %s128, %s130
      %p134 = scmp.eq.s32.totalorder %s17, 0
      %p135 = por %p133, %p134
      %p136 = scmp.ne.s32.totalorder %s128, %s130
      %p137 = scmp.eq.s32.totalorder %s22, 3
      %p138 = por %p136, %p137
      %p139 = scmp.ne.s32.totalorder %s130, %s131
      %p140 = scmp.eq.s32.totalorder %s22, 0
      %p141 = por %p139, %p140
      %p142 = scmp.ne.s32.totalorder %s130, %s131
      %p143 = scmp.eq.s32.totalorder %s23, 3
      %p144 = por %p142, %p143
      %p146 = scmp.ne.s32.totalorder %s131, %s145
      %p147 = scmp.eq.s32.totalorder %s23, 0
      %p148 = por %p146, %p147
      %s149 = ssub.s32 %s24, %s36
      %s150 = ssub.s32 %s25, %s32
      %s151 = sor.u32 %s149, %s150
      %p152 = scmp.eq.s32.totalorder %s151, 0
      %s154 = sadd.s32 %s153, 1
      %s155 = scalar_select %p152, %s153, %s154
      %p158 = pneg %p152
      %p159 = scmp.eq.s32.totalorder %s17, 3
      %p160 = por %p158, %p159
      %p161 = scmp.ne.s32.totalorder %s153, %s156
      %p162 = scmp.eq.s32.totalorder %s17, 0
      %p163 = por %p161, %p162
      %p164 = scmp.ne.s32.totalorder %s153, %s156
      %p165 = scmp.eq.s32.totalorder %s22, 3
      %p166 = por %p164, %p165
      %p167 = scmp.ne.s32.totalorder %s156, %s157
      %p168 = scmp.eq.s32.totalorder %s22, 0
      %p169 = por %p167, %p168
      %p170 = scmp.ne.s32.totalorder %s156, %s157
      %p171 = scmp.eq.s32.totalorder %s23, 3
      %p172 = por %p170, %p171
      %p174 = scmp.ne.s32.totalorder %s157, %s173
      %p175 = scmp.eq.s32.totalorder %s23, 0
      %p176 = por %p174, %p175
      %p177 = scmp.le.s32.totalorder 1, %s17
      %p178 = scmp.lt.s32.totalorder %s17, 5
      %p179 = pnand %p177, %p178
      %p180 = pneg %p179
      // Predicated region
      $region9: #{tpu_custom_call.1} parent=5 // pred_check
        _
      $region10: #{tpu_custom_call.1} parent=5 // pred_check_branch
        %182 = sbr.rel (%p179) target = $region12
      $region11: #{tpu_custom_call.1} parent=5 // pred_region
        %s183 = ssub.s32 %s17, 1
        // Predicated region
        $region13: #{tpu_custom_call.1} parent=11 // pred_check
          %p184 = pneg %p78
        $region14: #{tpu_custom_call.1} parent=11 // pred_check_branch
          %186 = sbr.rel (%p184) target = $region16
        $region15: #{tpu_custom_call.1} parent=11 // pred_region
          _
        $region16: #{tpu_custom_call.1} parent=11 // pred_fallthru
          _
        // Predicated region
        $region17: #{tpu_custom_call.1} parent=11 // pred_check
          %p187 = pneg %p99
        $region18: #{tpu_custom_call.1} parent=11 // pred_check_branch
          %189 = sbr.rel (%p187) target = $region20
        $region19: #{tpu_custom_call.1} parent=11 // pred_region
          _
        $region20: #{tpu_custom_call.1} parent=11 // pred_fallthru
          _
        // Predicated region
        $region21: #{tpu_custom_call.1} parent=11 // pred_check
          %p190 = pneg %p120
        $region22: #{tpu_custom_call.1} parent=11 // pred_check_branch
          %192 = sbr.rel (%p190) target = $region24
        $region23: #{tpu_custom_call.1} parent=11 // pred_region
          _
        $region24: #{tpu_custom_call.1} parent=11 // pred_fallthru
          _
        // Predicated region
        $region25: #{tpu_custom_call.1} parent=11 // pred_check
          %p193 = pneg %p141
        $region26: #{tpu_custom_call.1} parent=11 // pred_check_branch
          %195 = sbr.rel (%p193) target = $region28
        $region27: #{tpu_custom_call.1} parent=11 // pred_region
          _
        $region28: #{tpu_custom_call.1} parent=11 // pred_fallthru
          _
      $region12: #{tpu_custom_call.1} parent=5 // pred_fallthru
        _
      %p196 = scmp.lt.s32.totalorder %s17, 4
      // Predicated region
      $region29: #{tpu_custom_call.1} parent=5 // pred_check
        %p197 = pneg %p196
      $region30: #{tpu_custom_call.1} parent=5 // pred_check_branch
        %199 = sbr.rel (%p197) target = $region32
      $region31: #{tpu_custom_call.1} parent=5 // pred_region
        // Predicated region
        $region33: #{tpu_custom_call.1} parent=31 // pred_check
          %p200 = pneg %p51
        $region34: #{tpu_custom_call.1} parent=31 // pred_check_branch
          %202 = sbr.rel (%p200) target = $region36
        $region35: #{tpu_custom_call.1} parent=31 // pred_region
          %s203 = sand.u32 %s41, 1
          %s204 = scalar_lea.sflag [#allocation3], %s203
          %s205 = sand.u32 %s41, 1
          %s206 = smul.addr %s205, 96
          %s207 = scalar_lea.vmem [#allocation2], %s206
          %s208 = smul.u32 4, %s25
          %s210 = ssub.s32 1536, 1536
          %211 = vsyncadd %s204, %s210
          %s212 = smul.addr %s24, 24
          %s213 = sadd.s32 %s208, %s212
          %s214 = smul.addr %s213, 128
          %s215 = scalar_lea.hbm %s0, %s214
          %s216 = sshll.u32 %s207, 4
          %s217 = int_to_ptr.vmem [resolvable:$true] %s216
          %222 = dma.hbm_to_vmem [thread:$0]  %s215, 1536, %s217, %s204, 1024, 512, 32
        $region36: #{tpu_custom_call.1} parent=31 // pred_fallthru
          _
      $region32: #{tpu_custom_call.1} parent=5 // pred_fallthru
        _
      %p223 = scmp.le.s32.totalorder 1, %s17
      %p224 = scmp.lt.s32.totalorder %s17, 5
      %p225 = pnand %p223, %p224
      %p226 = pneg %p225
      // Predicated region
      $region37: #{tpu_custom_call.1} parent=5 // pred_check
        _
      $region38: #{tpu_custom_call.1} parent=5 // pred_check_branch
        %228 = sbr.rel (%p225) target = $region40
      $region39: #{tpu_custom_call.1} parent=5 // pred_region
        %s229 = ssub.s32 %s17, 1
        %s230 = sand.u32 %s44, 1
        %s231 = scalar_lea.sflag [#allocation3], %s230
        %s232 = sand.u32 %s44, 1
        %s233 = smul.addr %s232, 96
        %s234 = scalar_lea.vmem [#allocation2], %s233
        // Predicated region
        $region41: #{tpu_custom_call.1} parent=39 // pred_check
          %p235 = pneg %p57
        $region42: #{tpu_custom_call.1} parent=39 // pred_check_branch
          %237 = sbr.rel (%p235) target = $region44
        $region43: #{tpu_custom_call.1} parent=39 // pred_region
          %238 = dma.done %s231, 1536
        $region44: #{tpu_custom_call.1} parent=39 // pred_fallthru
          _
        %s239 = sand.u32 %s44, 1
        %s240 = scalar_lea.sflag [#allocation3], %s239
        %s241 = sand.u32 %s44, 1
        %s242 = smul.addr %s241, 96
        %s243 = scalar_lea.vmem [#allocation2], %s242
        %p244 = pneg %p57
        %p245 = pneg %p54
        %p246 = pneg %p78
        %p247 = pneg %p75
        %p248 = pneg %p99
        %p249 = pneg %p96
        %p250 = pneg %p120
        %p251 = pneg %p117
        %p252 = pneg %p141
        %p253 = pneg %p138
        %p254 = pneg %p169
        %p255 = pneg %p166
        %s256 = sand.u32 %s156, 1
        %s257 = scalar_lea.sflag [#allocation4], %s256
        %s258 = sand.u32 %s156, 1
        %s259 = smul.addr %s258, 96
        %s260 = scalar_lea.vmem [#allocation5], %s259
        %s261 = smul.u32 4, %s27
        %s262 = smul.u32 4, %s27
        %v263 = vld [vmem:[%s1] sm:$0xff]
        %v264 = vld [vmem:[%s234] sm:$0xff]
        %v265 = vld [vmem:[%s234 + $0x8] sm:$0xff]
        %v266 = vld [vmem:[%s234 + $0x10] sm:$0xff]
        %v267 = vld [vmem:[%s234 + $0x18] sm:$0xff]
        %v268 = vld [vmem:[%s234 + $0x20] sm:$0xff]
        %v269 = vld [vmem:[%s234 + $0x28] sm:$0xff]
        %v270 = vld [vmem:[%s234 + $0x30] sm:$0xff]
        %v271 = vld [vmem:[%s234 + $0x38] sm:$0xff]
        %v272 = vld [vmem:[%s234 + $0x40] sm:$0xff]
        %v273 = vld [vmem:[%s234 + $0x48] sm:$0xff]
        %v274 = vld [vmem:[%s234 + $0x50] sm:$0xff]
        %v275 = vld [vmem:[%s234 + $0x58] sm:$0xff]
        %v276 = vld [vmem:[%s2] sm:$0xff]
        %278 = vset.pattern.permute.xlu0 0
        %279 = vperm.xlu0 %278, %v276
        %v280 = vpop.permute.xlu0 %279
        %vm282 = vcmask 195584
        %v284 = vsel %vm282, %v263, 0
        %286 = vmatprep.subr.mxu0 %v265
        %287 = vmatpush1.msra.mxu0 %v264
        %288 = vmatprep.subr.mxu0 %v269
        %289 = vmatpush1.msra.mxu0 %v268
        %290 = vmatprep.subr.mxu0 %v273
        %291 = vmatpush1.msra.mxu0 %v272
        %292 = vmatprep.subr.mxu0 0.0
        %293 = vmatpush1.msra.mxu0 0.0
        %294 = vmatprep.subr.mxu0 0.0
        %295 = vmatpush1.msra.mxu0 0.0
        %296 = vmatprep.subr.mxu0 0.0
        %297 = vmatpush1.msra.mxu0 0.0
        %298 = vmatprep.subr.mxu0 0.0
        %299 = vmatpush1.msra.mxu0 0.0
        %300 = vmatprep.subr.mxu0 0.0
        %301 = vmatpush1.msra.mxu0 0.0
        %302 = vmatprep.subr.mxu0 0.0
        %303 = vmatpush1.msra.mxu0 0.0
        %304 = vmatprep.subr.mxu0 0.0
        %305 = vmatpush1.msra.mxu0 0.0
        %306 = vmatprep.subr.mxu0 0.0
        %307 = vmatpush1.msra.mxu0 0.0
        %308 = vmatprep.subr.mxu0 0.0
        %309 = vmatpush1.msra.mxu0 0.0
        %310 = vmatprep.subr.mxu0 0.0
        %311 = vmatpush1.msra.mxu0 0.0
        %312 = vmatprep.subr.mxu0 0.0
        %313 = vmatpush1.msra.mxu0 0.0
        %314 = vmatprep.subr.mxu0 0.0
        %315 = vmatpush1.msra.mxu0 0.0
        %316 = vmatprep.subr.mxu0 0.0
        %317 = vmatpush1.msra.mxu0 0.0
        %318 = vmatprep.subr.mxu0 0.0
        %319 = vmatpush1.msra.mxu0 0.0
        %320 = vmatprep.subr.mxu0 0.0
        %321 = vmatpush1.msra.mxu0 0.0
        %322 = vmatprep.subr.mxu0 0.0
        %323 = vmatpush1.msra.mxu0 0.0
        %324 = vmatprep.subr.mxu0 0.0
        %325 = vmatpush1.msra.mxu0 0.0
        %326 = vmatprep.subr.mxu0 0.0
        %327 = vmatpush1.msra.mxu0 0.0
        %328 = vmatprep.subr.mxu0 0.0
        %329 = vmatpush1.msra.mxu0 0.0
        %330 = vmatprep.subr.mxu0 0.0
        %331 = vmatpush1.msra.mxu0 0.0
        %332 = vmatprep.subr.mxu0 0.0
        %333 = vmatpush1.msra.mxu0 0.0
        %334 = vmatprep.subr.mxu0 0.0
        %335 = vmatpush1.msra.mxu0 0.0
        %336 = vmatprep.subr.mxu0 0.0
        %337 = vmatpush1.msra.mxu0 0.0
        %338 = vmatprep.subr.mxu0 0.0
        %339 = vmatpush1.msra.mxu0 0.0
        %340 = vmatprep.subr.mxu0 0.0
        %341 = vmatpush1.msra.mxu0 0.0
        %342 = vmatprep.subr.mxu0 0.0
        %343 = vmatpush1.msra.mxu0 0.0
        %344 = vmatprep.subr.mxu0 0.0
        %345 = vmatpush1.msra.mxu0 0.0
        %346 = vmatprep.subr.mxu0 0.0
        %347 = vmatpush1.msra.mxu0 0.0
        %348 = vmatprep.subr.mxu0 0.0
        %349 = vmatpush1.msra.mxu0 0.0
        %350 = vmatprep.mubr.f32.mxu0 0.0
        %351 = vmatmul.mubr.f32.gmra.mrb[0].mxu0 %v284
        %v352 = vpop.f32.mrb[0].mxu0
        %v353 = vadd.f32 %v280, %v352
        %v354 = vpop.f32.mrb[0].mxu0
        %v355 = vadd.f32 %v280, %v354
        %356 = vdwg.mxu0
        %357 = vmatprep.subr.mxu0 %v267
        %358 = vmatpush1.msra.mxu0 %v266
        %359 = vmatprep.subr.mxu0 %v271
        %360 = vmatpush1.msra.mxu0 %v270
        %361 = vmatprep.subr.mxu0 %v275
        %362 = vmatpush1.msra.mxu0 %v274
        %363 = vmatprep.subr.mxu0 0.0
        %364 = vmatpush1.msra.mxu0 0.0
        %365 = vmatprep.subr.mxu0 0.0
        %366 = vmatpush1.msra.mxu0 0.0
        %367 = vmatprep.subr.mxu0 0.0
        %368 = vmatpush1.msra.mxu0 0.0
        %369 = vmatprep.subr.mxu0 0.0
        %370 = vmatpush1.msra.mxu0 0.0
        %371 = vmatprep.subr.mxu0 0.0
        %372 = vmatpush1.msra.mxu0 0.0
        %373 = vmatprep.subr.mxu0 0.0
        %374 = vmatpush1.msra.mxu0 0.0
        %375 = vmatprep.subr.mxu0 0.0
        %376 = vmatpush1.msra.mxu0 0.0
        %377 = vmatprep.subr.mxu0 0.0
        %378 = vmatpush1.msra.mxu0 0.0
        %379 = vmatprep.subr.mxu0 0.0
        %380 = vmatpush1.msra.mxu0 0.0
        %381 = vmatprep.subr.mxu0 0.0
        %382 = vmatpush1.msra.mxu0 0.0
        %383 = vmatprep.subr.mxu0 0.0
        %384 = vmatpush1.msra.mxu0 0.0
        %385 = vmatprep.subr.mxu0 0.0
        %386 = vmatpush1.msra.mxu0 0.0
        %387 = vmatprep.subr.mxu0 0.0
        %388 = vmatpush1.msra.mxu0 0.0
        %389 = vmatprep.subr.mxu0 0.0
        %390 = vmatpush1.msra.mxu0 0.0
        %391 = vmatprep.subr.mxu0 0.0
        %392 = vmatpush1.msra.mxu0 0.0
        %393 = vmatprep.subr.mxu0 0.0
        %394 = vmatpush1.msra.mxu0 0.0
        %395 = vmatprep.subr.mxu0 0.0
        %396 = vmatpush1.msra.mxu0 0.0
        %397 = vmatprep.subr.mxu0 0.0
        %398 = vmatpush1.msra.mxu0 0.0
        %399 = vmatprep.subr.mxu0 0.0
        %400 = vmatpush1.msra.mxu0 0.0
        %401 = vmatprep.subr.mxu0 0.0
        %402 = vmatpush1.msra.mxu0 0.0
        %403 = vmatprep.subr.mxu0 0.0
        %404 = vmatpush1.msra.mxu0 0.0
        %405 = vmatprep.subr.mxu0 0.0
        %406 = vmatpush1.msra.mxu0 0.0
        %407 = vmatprep.subr.mxu0 0.0
        %408 = vmatpush1.msra.mxu0 0.0
        %409 = vmatprep.subr.mxu0 0.0
        %410 = vmatpush1.msra.mxu0 0.0
        %411 = vmatprep.subr.mxu0 0.0
        %412 = vmatpush1.msra.mxu0 0.0
        %413 = vmatprep.subr.mxu0 0.0
        %414 = vmatpush1.msra.mxu0 0.0
        %415 = vmatprep.subr.mxu0 0.0
        %416 = vmatpush1.msra.mxu0 0.0
        %417 = vmatprep.subr.mxu0 0.0
        %418 = vmatpush1.msra.mxu0 0.0
        %419 = vmatprep.subr.mxu0 0.0
        %420 = vmatpush1.msra.mxu0 0.0
        %421 = vmatprep.mubr.f32.mxu0 0.0
        %422 = vmatmul.mubr.f32.gmra.mrb[0].mxu0 %v284
        %v423 = vpop.f32.mrb[0].mxu0
        %v424 = vadd.f32 %v280, %v423
        %v425 = vpop.f32.mrb[0].mxu0
        %v426 = vadd.f32 %v280, %v425
        %427 = vdwg.mxu0
        %v428 = vld [vmem:[%s3] sm:$0xff]
        %v429 = vld [vmem:[%s3 + $0x8] sm:$0xff]
        %v430 = vld [vmem:[%s3 + $0x10] sm:$0xff]
        %v431 = vld [vmem:[%s4] sm:$0xff]
        %v432 = vld [vmem:[%s4 + $0x8] sm:$0xff]
        %v433 = vld [vmem:[%s4 + $0x10] sm:$0xff]
        %435 = vset.pattern.permute.xlu0 0
        %436 = vperm.xlu0 %435, %v431
        %v437 = vpop.permute.xlu0 %436
        %440 = vset.pattern.permute.xlu0 0
        %441 = vperm.xlu0 %440, %v432
        %v442 = vpop.permute.xlu0 %441
        %445 = vset.pattern.permute.xlu0 0
        %446 = vperm.xlu0 %445, %v433
        %v447 = vpop.permute.xlu0 %446
        %vm449 = vcmask 64512
        %v451 = vsel %vm449, %v428, 0
        %v454 = vsel %vm449, %v429, 0
        %v457 = vsel %vm449, %v430, 0
        %459 = vmatprep.subr.mxu0 %v355
        %460 = vmatpush1.msra.mxu0 %v353
        %461 = vmatprep.subr.mxu0 0.0
        %462 = vmatpush1.msra.mxu0 0.0
        %463 = vmatprep.subr.mxu0 0.0
        %464 = vmatpush1.msra.mxu0 0.0
        %465 = vmatprep.subr.mxu0 0.0
        %466 = vmatpush1.msra.mxu0 0.0
        %467 = vmatprep.subr.mxu0 0.0
        %468 = vmatpush1.msra.mxu0 0.0
        %469 = vmatprep.subr.mxu0 0.0
        %470 = vmatpush1.msra.mxu0 0.0
        %471 = vmatprep.subr.mxu0 0.0
        %472 = vmatpush1.msra.mxu0 0.0
        %473 = vmatprep.subr.mxu0 0.0
        %474 = vmatpush1.msra.mxu0 0.0
        %475 = vmatprep.subr.mxu0 0.0
        %476 = vmatpush1.msra.mxu0 0.0
        %477 = vmatprep.subr.mxu0 0.0
        %478 = vmatpush1.msra.mxu0 0.0
        %479 = vmatprep.subr.mxu0 0.0
        %480 = vmatpush1.msra.mxu0 0.0
        %481 = vmatprep.subr.mxu0 0.0
        %482 = vmatpush1.msra.mxu0 0.0
        %483 = vmatprep.subr.mxu0 0.0
        %484 = vmatpush1.msra.mxu0 0.0
        %485 = vmatprep.subr.mxu0 0.0
        %486 = vmatpush1.msra.mxu0 0.0
        %487 = vmatprep.subr.mxu0 0.0
        %488 = vmatpush1.msra.mxu0 0.0
        %489 = vmatprep.subr.mxu0 0.0
        %490 = vmatpush1.msra.mxu0 0.0
        %491 = vmatprep.subr.mxu0 0.0
        %492 = vmatpush1.msra.mxu0 0.0
        %493 = vmatprep.subr.mxu0 0.0
        %494 = vmatpush1.msra.mxu0 0.0
        %495 = vmatprep.subr.mxu0 0.0
        %496 = vmatpush1.msra.mxu0 0.0
        %497 = vmatprep.subr.mxu0 0.0
        %498 = vmatpush1.msra.mxu0 0.0
        %499 = vmatprep.subr.mxu0 0.0
        %500 = vmatpush1.msra.mxu0 0.0
        %501 = vmatprep.subr.mxu0 0.0
        %502 = vmatpush1.msra.mxu0 0.0
        %503 = vmatprep.subr.mxu0 0.0
        %504 = vmatpush1.msra.mxu0 0.0
        %505 = vmatprep.subr.mxu0 0.0
        %506 = vmatpush1.msra.mxu0 0.0
        %507 = vmatprep.subr.mxu0 0.0
        %508 = vmatpush1.msra.mxu0 0.0
        %509 = vmatprep.subr.mxu0 0.0
        %510 = vmatpush1.msra.mxu0 0.0
        %511 = vmatprep.subr.mxu0 0.0
        %512 = vmatpush1.msra.mxu0 0.0
        %513 = vmatprep.subr.mxu0 0.0
        %514 = vmatpush1.msra.mxu0 0.0
        %515 = vmatprep.subr.mxu0 0.0
        %516 = vmatpush1.msra.mxu0 0.0
        %517 = vmatprep.subr.mxu0 0.0
        %518 = vmatpush1.msra.mxu0 0.0
        %519 = vmatprep.subr.mxu0 0.0
        %520 = vmatpush1.msra.mxu0 0.0
        %521 = vmatprep.subr.mxu0 0.0
        %522 = vmatpush1.msra.mxu0 0.0
        %523 = vmatprep.mubr.f32.mxu0 0.0
        %524 = vmatmul.mubr.f32.gmra.mrb[0].mxu0 %v451
        %v525 = vpop.f32.mrb[0].mxu0
        %v526 = vadd.f32 %v437, %v525
        %v527 = vpop.f32.mrb[0].mxu0
        %v528 = vadd.f32 %v437, %v527
        %529 = vmatprep.mubr.f32.mxu0 0.0
        %530 = vmatmul.mubr.f32.gmra.mrb[0].mxu0 %v454
        %v531 = vpop.f32.mrb[0].mxu0
        %v532 = vadd.f32 %v442, %v531
        %v533 = vpop.f32.mrb[0].mxu0
        %v534 = vadd.f32 %v442, %v533
        %535 = vmatprep.mubr.f32.mxu0 0.0
        %536 = vmatmul.mubr.f32.gmra.mrb[0].mxu0 %v457
        %v537 = vpop.f32.mrb[0].mxu0
        %v538 = vadd.f32 %v447, %v537
        %v539 = vpop.f32.mrb[0].mxu0
        %v540 = vadd.f32 %v447, %v539
        %541 = vdwg.mxu0
        %542 = vmatprep.subr.mxu0 %v426
        %543 = vmatpush1.msra.mxu0 %v424
        %544 = vmatprep.subr.mxu0 0.0
        %545 = vmatpush1.msra.mxu0 0.0
        %546 = vmatprep.subr.mxu0 0.0
        %547 = vmatpush1.msra.mxu0 0.0
        %548 = vmatprep.subr.mxu0 0.0
        %549 = vmatpush1.msra.mxu0 0.0
        %550 = vmatprep.subr.mxu0 0.0
        %551 = vmatpush1.msra.mxu0 0.0
        %552 = vmatprep.subr.mxu0 0.0
        %553 = vmatpush1.msra.mxu0 0.0
        %554 = vmatprep.subr.mxu0 0.0
        %555 = vmatpush1.msra.mxu0 0.0
        %556 = vmatprep.subr.mxu0 0.0
        %557 = vmatpush1.msra.mxu0 0.0
        %558 = vmatprep.subr.mxu0 0.0
        %559 = vmatpush1.msra.mxu0 0.0
        %560 = vmatprep.subr.mxu0 0.0
        %561 = vmatpush1.msra.mxu0 0.0
        %562 = vmatprep.subr.mxu0 0.0
        %563 = vmatpush1.msra.mxu0 0.0
        %564 = vmatprep.subr.mxu0 0.0
        %565 = vmatpush1.msra.mxu0 0.0
        %566 = vmatprep.subr.mxu0 0.0
        %567 = vmatpush1.msra.mxu0 0.0
        %568 = vmatprep.subr.mxu0 0.0
        %569 = vmatpush1.msra.mxu0 0.0
        %570 = vmatprep.subr.mxu0 0.0
        %571 = vmatpush1.msra.mxu0 0.0
        %572 = vmatprep.subr.mxu0 0.0
        %573 = vmatpush1.msra.mxu0 0.0
        %574 = vmatprep.subr.mxu0 0.0
        %575 = vmatpush1.msra.mxu0 0.0
        %576 = vmatprep.subr.mxu0 0.0
        %577 = vmatpush1.msra.mxu0 0.0
        %578 = vmatprep.subr.mxu0 0.0
        %579 = vmatpush1.msra.mxu0 0.0
        %580 = vmatprep.subr.mxu0 0.0
        %581 = vmatpush1.msra.mxu0 0.0
        %582 = vmatprep.subr.mxu0 0.0
        %583 = vmatpush1.msra.mxu0 0.0
        %584 = vmatprep.subr.mxu0 0.0
        %585 = vmatpush1.msra.mxu0 0.0
        %586 = vmatprep.subr.mxu0 0.0
        %587 = vmatpush1.msra.mxu0 0.0
        %588 = vmatprep.subr.mxu0 0.0
        %589 = vmatpush1.msra.mxu0 0.0
        %590 = vmatprep.subr.mxu0 0.0
        %591 = vmatpush1.msra.mxu0 0.0
        %592 = vmatprep.subr.mxu0 0.0
        %593 = vmatpush1.msra.mxu0 0.0
        %594 = vmatprep.subr.mxu0 0.0
        %595 = vmatpush1.msra.mxu0 0.0
        %596 = vmatprep.subr.mxu0 0.0
        %597 = vmatpush1.msra.mxu0 0.0
        %598 = vmatprep.subr.mxu0 0.0
        %599 = vmatpush1.msra.mxu0 0.0
        %600 = vmatprep.subr.mxu0 0.0
        %601 = vmatpush1.msra.mxu0 0.0
        %602 = vmatprep.subr.mxu0 0.0
        %603 = vmatpush1.msra.mxu0 0.0
        %604 = vmatprep.subr.mxu0 0.0
        %605 = vmatpush1.msra.mxu0 0.0
        %606 = vmatprep.mubr.f32.mxu0 0.0
        %607 = vmatmul.mubr.f32.gmra.mrb[0].mxu0 %v451
        %v608 = vpop.f32.mrb[0].mxu0
        %v609 = vadd.f32 %v437, %v608
        %v610 = vpop.f32.mrb[0].mxu0
        %v611 = vadd.f32 %v437, %v610
        %612 = vmatprep.mubr.f32.mxu0 0.0
        %613 = vmatmul.mubr.f32.gmra.mrb[0].mxu0 %v454
        %v614 = vpop.f32.mrb[0].mxu0
        %v615 = vadd.f32 %v442, %v614
        %v616 = vpop.f32.mrb[0].mxu0
        %v617 = vadd.f32 %v442, %v616
        %618 = vmatprep.mubr.f32.mxu0 0.0
        %619 = vmatmul.mubr.f32.gmra.mrb[0].mxu0 %v457
        %v620 = vpop.f32.mrb[0].mxu0
        %v621 = vadd.f32 %v447, %v620
        %v622 = vpop.f32.mrb[0].mxu0
        %v623 = vadd.f32 %v447, %v622
        %624 = vdwg.mxu0
        %625 = vst [vmem:[%s260] sm:$0xff] %v526
        %626 = vst [vmem:[%s260 + $0x8] sm:$0xff] %v528
        %627 = vst [vmem:[%s260 + $0x10] sm:$0xff] %v609
        %628 = vst [vmem:[%s260 + $0x18] sm:$0xff] %v611
        %629 = vst [vmem:[%s260 + $0x20] sm:$0xff] %v532
        %630 = vst [vmem:[%s260 + $0x28] sm:$0xff] %v534
        %631 = vst [vmem:[%s260 + $0x30] sm:$0xff] %v615
        %632 = vst [vmem:[%s260 + $0x38] sm:$0xff] %v617
        %633 = vst [vmem:[%s260 + $0x40] sm:$0xff] %v538
        %634 = vst [vmem:[%s260 + $0x48] sm:$0xff] %v540
        %635 = vst [vmem:[%s260 + $0x50] sm:$0xff] %v621
        %636 = vst [vmem:[%s260 + $0x58] sm:$0xff] %v623
        %s637 = sand.u32 %s156, 1
        %s638 = scalar_lea.sflag [#allocation4], %s637
        %s639 = sand.u32 %s156, 1
        %s640 = smul.addr %s639, 96
        %s641 = scalar_lea.vmem [#allocation5], %s640
        // Predicated region
        $region45: #{tpu_custom_call.1} parent=39 // pred_check
          %p642 = pneg %p166
        $region46: #{tpu_custom_call.1} parent=39 // pred_check_branch
          %644 = sbr.rel (%p642) target = $region48
        $region47: #{tpu_custom_call.1} parent=39 // pred_region
          %s645 = smul.u32 4, %s27
          %s647 = ssub.s32 1536, 1536
          %648 = vsyncadd %s638, %s647
          %s649 = smul.addr %s26, 24
          %s650 = sadd.s32 %s645, %s649
          %s651 = smul.addr %s650, 128
          %s652 = scalar_lea.hbm %s5, %s651
          %s653 = sshll.u32 %s641, 4
          %s654 = int_to_ptr.vmem [resolvable:$true] %s653
          %659 = dma.vmem_to_hbm [thread:$0]  %s654, 1536, %s652, %s638, 512, 1024, 32
        $region48: #{tpu_custom_call.1} parent=39 // pred_fallthru
          _
      $region40: #{tpu_custom_call.1} parent=5 // pred_fallthru
        _
      %p660 = scmp.le.s32.totalorder 2, %s17
      // Predicated region
      $region49: #{tpu_custom_call.1} parent=5 // pred_check
        %p661 = pneg %p660
      $region50: #{tpu_custom_call.1} parent=5 // pred_check_branch
        %663 = sbr.rel (%p661) target = $region52
      $region51: #{tpu_custom_call.1} parent=5 // pred_region
        %s664 = ssub.s32 %s17, 2
        // Predicated region
        $region53: #{tpu_custom_call.1} parent=51 // pred_check
          %p665 = pneg %p172
        $region54: #{tpu_custom_call.1} parent=51 // pred_check_branch
          %667 = sbr.rel (%p665) target = $region56
        $region55: #{tpu_custom_call.1} parent=51 // pred_region
          %s668 = sand.u32 %s157, 1
          %s669 = scalar_lea.sflag [#allocation4], %s668
          %s670 = sand.u32 %s157, 1
          %s671 = smul.addr %s670, 96
          %s672 = scalar_lea.vmem [#allocation5], %s671
          %673 = dma.done %s669, 1536
        $region56: #{tpu_custom_call.1} parent=51 // pred_fallthru
          _
      $region52: #{tpu_custom_call.1} parent=5 // pred_fallthru
        _
    $region6: #{tpu_custom_call.1} parent=1 // loop_footer
      %s21 = sadd.s32 1, %s17
    $region7: #{tpu_custom_call.1} parent=1 // loop_footer_branch
      %16 = sbr.rel target = $region3
    $region8: #{tpu_custom_call.1} parent=1 // loop_exit
      _
    %674 = vsyncpa [#allocation3], 1
    %s675 = scalar_lea.sflag [#allocation3], 1
    %676 = vsyncpa %s675, 1
    %677 = vsyncpa [#allocation4], 1
    %s678 = scalar_lea.sflag [#allocation4], 1
    %679 = vsyncpa %s678, 1

</llo_original>
